<compile_context>
chip_gen: v7x
topology: tpu7x:2x2x1
jax: 0.10.0
libtpu: 0.0.40
codegen_flags: <defaults>
</compile_context>

<pallas_src>
import functools
import math

import jax
import jax.numpy as jnp
from jax.experimental import pallas as pl
from jax.experimental.pallas import tpu as pltpu


def _round_up(x, m):
    return ((x + m - 1) // m) * m


def _posemb_kernel(x_ref, w_ref, b_ref, m_ref, pe_ref, o_ref, *, pe_blocks):
    """One (TM, Dp) output tile:  o = (x @ W + b) * mask + PE.

    sqrt(D) is already folded into W and b by the wrapper.
      x_ref : (TM, F)                 input rows (any float dtype)
      w_ref : (F, Dp)    bf16         weight, sqrt(D) folded in
      b_ref : (1, Dp)    f32          bias,   sqrt(D) folded in
      m_ref : (TM, 1)    f32          per-row mask
      pe_ref: (nb, TM, Dp) bf16       positional-encoding table / block
      o_ref : (TM, Dp)                output tile
    """
    xq = x_ref[...].astype(w_ref.dtype)                       # MXU dtype
    y = jnp.dot(xq, w_ref[...], preferred_element_type=jnp.float32)
    y = (y + b_ref[...]) * m_ref[...]
    if pe_blocks > 1:
        pe = pe_ref[pl.program_id(0) % pe_blocks]              # resident table
    else:
        pe = pe_ref[0]                                         # single block
    o_ref[...] = (y + pe.astype(jnp.float32)).astype(o_ref.dtype)


def pos_emb_forward(x, mask, w, b, pe, *, tm=256,
                    compute_dtype=jnp.bfloat16, out_dtype=jnp.bfloat16):
    """x: (B,T,F), mask: (B,T,1), w: (F,D), b: (D,), pe: (T,D) -> (B,T,D).

    tm: target row-tile size (rows of the flattened (B*Tp, F) input).

    Per-step VMEM (every block double-buffered by Pallas):
        2 * ( TM*F*bytes(x) + TM*4 + TM*Dp*bytes(out)
              + F*Dp*2 + Dp*4 + PE_rows*Dp*2 )
    where PE_rows = Tp when the PE table is resident, else TM.  Compare this
    against the ~32 MiB scoped default; on v7x stay under the 64 MiB physical
    per-TensorCore budget (shrink tm rather than exceeding it).
    """
    if mask.ndim == 2:
        mask = mask[..., None]
    B, T, F = x.shape
    D = w.shape[1]
    scale = math.sqrt(D)

    # ---- tile sizing --------------------------------------------------------
    Dp = _round_up(D, 128)              # lane-dense output last dim
    t16 = _round_up(T, 16)              # bf16 packs 2 rows/sublane

    if t16 <= tm:
        # Small-T: pack several whole batches per row tile.
        Tp = t16
        k_max = max(1, min(tm // Tp, B))
        kb = 1
        for cand in range(1, k_max + 1):
            pad = _round_up(B, cand) - B
            if pad * 8 <= B:            # allow at most ~12.5% padded batches
                kb = cand
        TM = kb * Tp
        Bp = _round_up(B, kb)
        n_t_blocks = 1
    else:
        # Large-T: MXU-friendly TM minimizing row padding (prefer larger on tie).
        cands = [c for c in (512, 256, 128) if c <= tm] or [max(16, (tm // 16) * 16)]
        TM = min(cands, key=lambda c: (_round_up(T, c), -c))
        Tp = _round_up(T, TM)
        Bp = B
        n_t_blocks = Tp // TM

    R = Bp * Tp                          # flattened row count; TM | R
    grid = (R // TM,)

    # ---- parameters: fold sqrt(D), pad D -> Dp ------------------------------
    w_s = (w.astype(jnp.float32) * scale).astype(compute_dtype)
    b_s = (b.astype(jnp.float32) * scale)
    if Dp != D:
        w_p = jnp.zeros((F, Dp), compute_dtype).at[:, :D].set(w_s)
        b_p = jnp.zeros((1, Dp), jnp.float32).at[0, :D].set(b_s)
    else:
        w_p = w_s
        b_p = b_s.reshape(1, Dp)

    # ---- positional-encoding table ------------------------------------------
    if (Tp, Dp) != (T, D):
        pe_pad = jnp.zeros((Tp, Dp), compute_dtype).at[:T, :D].set(
            pe.astype(compute_dtype))
    else:
        pe_pad = pe.astype(compute_dtype)

    if n_t_blocks == 1:
        # Small-T (or single time block): pre-tile the PE pattern to TM rows,
        # keep it resident with a constant block index.
        pe_tile = jnp.tile(pe_pad, (TM // Tp, 1)) if TM != Tp else pe_pad
        pe3 = pe_tile.reshape(1, TM, Dp)
        pe_blocks = 1
        pe_spec = pl.BlockSpec((1, TM, Dp), lambda i: (0, 0, 0))
    else:
        pe3 = pe_pad.reshape(n_t_blocks, TM, Dp)
        pe_table_bytes = pe3.size * jnp.dtype(compute_dtype).itemsize
        if pe_table_bytes <= (4 << 20):          # <= ~8 MiB double-buffered
            pe_blocks = n_t_blocks
            pe_spec = pl.BlockSpec((n_t_blocks, TM, Dp), lambda i: (0, 0, 0))
        else:
            # Fallback: per-step wrapping block (re-DMA'd), for huge PE tables.
            pe_blocks = 1
            nb = n_t_blocks
            pe_spec = pl.BlockSpec((1, TM, Dp), lambda i: (i % nb, 0, 0))

    # ---- flatten (B, T) rows; skip the pad copy when already aligned --------
    need_pad = (Bp != B) or (Tp != T)
    if need_pad:
        x_rows = (jnp.zeros((Bp, Tp, F), compute_dtype)
                  .at[:B, :T, :].set(x.astype(compute_dtype)).reshape(R, F))
        m_rows = (jnp.zeros((Bp, Tp, 1), jnp.float32)
                  .at[:B, :T, :].set(mask.astype(jnp.float32)).reshape(R, 1))
    else:
        x_rows = x.reshape(R, F)                 # native dtype; cast in-kernel
        m_rows = mask.astype(jnp.float32).reshape(R, 1)

    # ---- cost estimate + scoped-VMEM bookkeeping ----------------------------
    isz = lambda a: a.size * jnp.dtype(a.dtype).itemsize
    out_isz = jnp.dtype(out_dtype).itemsize
    cost = pl.CostEstimate(
        flops=2 * R * F * Dp,
        transcendentals=0,
        bytes_accessed=int(isz(x_rows) + isz(w_p) + isz(b_p) + isz(m_rows)
                           + isz(pe3) + R * Dp * out_isz))

    x_isz = jnp.dtype(x_rows.dtype).itemsize
    c_isz = jnp.dtype(compute_dtype).itemsize
    pe_blk_rows = pe3.shape[0] * TM if pe_blocks > 1 else TM
    vmem_est = 2 * (TM * F * x_isz + TM * 4 + TM * Dp * out_isz
                    + F * Dp * c_isz + Dp * 4 + pe_blk_rows * Dp * c_isz)
    compiler_kwargs = dict(dimension_semantics=("parallel",))
    if vmem_est > (28 << 20):
        compiler_kwargs["vmem_limit_bytes"] = int(min(vmem_est + (2 << 20), 64 << 20))

    out = pl.pallas_call(
        functools.partial(_posemb_kernel, pe_blocks=pe_blocks),
        out_shape=jax.ShapeDtypeStruct((R, Dp), out_dtype),
        grid_spec=pltpu.PrefetchScalarGridSpec(
            num_scalar_prefetch=0,
            grid=grid,
            in_specs=[
                pl.BlockSpec((TM, F), lambda i: (i, 0)),     # x rows
                pl.BlockSpec((F, Dp), lambda i: (0, 0)),     # weight (resident)
                pl.BlockSpec((1, Dp), lambda i: (0, 0)),     # bias   (resident)
                pl.BlockSpec((TM, 1), lambda i: (i, 0)),     # mask rows
                pe_spec,                                     # PE table / block
            ],
            out_specs=pl.BlockSpec((TM, Dp), lambda i: (i, 0)),
        ),
        compiler_params=pltpu.CompilerParams(**compiler_kwargs),
        cost_estimate=cost,
    )(x_rows, w_p, b_p, m_rows, pe3)

    # Strip row / lane padding and restore (B, T, D).
    out = out.reshape(Bp, Tp, Dp)
    if (Bp, Tp, Dp) != (B, T, D):
        out = out[:B, :T, :D]
    return out


def sinusoidal_pe(T, D, dtype=jnp.float32):
    """Standard transformer sinusoidal positional encoding, shape (T, D)."""
    pos = jnp.arange(T, dtype=jnp.float32)[:, None]
    i = jnp.arange(0, D, 2, dtype=jnp.float32)[None, :]
    div = jnp.exp(-(math.log(10000.0)) * i / D)
    angles = pos * div
    pe = jnp.zeros((T, D), dtype=jnp.float32)
    pe = pe.at[:, 0::2].set(jnp.sin(angles))
    pe = pe.at[:, 1::2].set(jnp.cos(angles))
    return pe.astype(dtype)


def reference_forward(x, mask, w, b, pe, compute_dtype=jnp.bfloat16,
                      out_dtype=jnp.bfloat16):
    """Pure-JAX reference mirroring the kernel's bf16 I/O + f32 accumulation."""
    D = w.shape[1]
    scale = math.sqrt(D)
    xq = x.astype(compute_dtype)
    wq = (w.astype(jnp.float32) * scale).astype(compute_dtype)
    bq = b.astype(jnp.float32) * scale
    peq = pe.astype(compute_dtype).astype(jnp.float32)
    y = jnp.einsum("btf,fd->btd", xq, wq, preferred_element_type=jnp.float32)
    y = (y + bq[None, None, :]) * mask.astype(jnp.float32)
    return (y + peq[None, :, :]).astype(out_dtype)


if __name__ == "__main__":
    master = jax.random.PRNGKey(0)

    def run_case(case_idx, B, T, F, D):
        key = jax.random.fold_in(master, case_idx)
        kx, kw, kb_ = jax.random.split(key, 3)
        x = jax.random.normal(kx, (B, T, F), dtype=jnp.float32)
        w = jax.random.normal(kw, (F, D), dtype=jnp.float32) / math.sqrt(F)
        b = jax.random.normal(kb_, (D,), dtype=jnp.float32) * 0.01
        # Padding mask (1 = valid frame, 0 = padding), deterministic lengths.
        lengths = jnp.maximum(T - jnp.arange(B) * max(1, T // 4), T // 2)
        mask = (jnp.arange(T)[None, :] < lengths[:, None]).astype(jnp.float32)
        mask = mask[..., None]                                   # (B, T, 1)
        pe = sinusoidal_pe(T, D)

        out = jax.block_until_ready(pos_emb_forward(x, mask, w, b, pe))
        ref = reference_forward(x, mask, w, b, pe)
        assert out.shape == (B, T, D)
        assert jnp.allclose(out.astype(jnp.float32), ref.astype(jnp.float32),
                            atol=2e-2, rtol=1e-2), f"case {case_idx}: mismatch"

    # Small-T path: batches packed into one row tile, pre-tiled resident PE.
    run_case(0, B=2, T=8, F=32, D=32)
    # Large-T path: resident (n_blocks, TM, Dp) PE table indexed by step % n.
    run_case(1, B=2, T=300, F=32, D=32)
    # Fully aligned path: no pad copies, x passed f32 and cast in-kernel.
    run_case(2, B=4, T=16, F=32, D=128)

    print("KERNEL_OK")
</pallas_src>

<mosaic_0001>
module attributes {stable_mosaic.version = 11 : i64} {
  func.func @_posemb_kernel(%arg0: i32, %arg1: memref<32x32xbf16, #tpu.memory_space<vmem>>, %arg2: memref<32x128xbf16, #tpu.memory_space<vmem>>, %arg3: memref<1x128xf32, #tpu.memory_space<vmem>>, %arg4: memref<32x1xf32, #tpu.memory_space<vmem>>, %arg5: memref<1x32x128xbf16, #tpu.memory_space<vmem>>, %arg6: memref<32x128xbf16, #tpu.memory_space<vmem>>) attributes {dimension_semantics = [#tpu.dimension_semantics<parallel>], iteration_bounds = array<i64: 1>, scalar_prefetch = 0 : i64, scratch_operands = 0 : i64, tpu.core_type = #tpu.core_type<tc>, window_params = [{transform_indices = @transform_0, window_bounds = array<i64: 32, 32>}, {pipeline_mode = #tpu.pipeline_mode<synchronous>, transform_indices = @transform_1, window_bounds = array<i64: 32, 128>}, {pipeline_mode = #tpu.pipeline_mode<synchronous>, transform_indices = @transform_2, window_bounds = array<i64: 1, 128>}, {transform_indices = @transform_3, window_bounds = array<i64: 32, 1>}, {pipeline_mode = #tpu.pipeline_mode<synchronous>, transform_indices = @transform_4, window_bounds = array<i64: 1, 32, 128>}, {transform_indices = @transform_5, window_bounds = array<i64: 32, 128>}]} {
    %c0 = arith.constant 0 : index
    %c0_0 = arith.constant 0 : index
    %0 = vector.load %arg1[%c0, %c0_0] : memref<32x32xbf16, #tpu.memory_space<vmem>>, vector<32x32xbf16>
    %c0_1 = arith.constant 0 : index
    %c0_2 = arith.constant 0 : index
    %1 = vector.load %arg2[%c0_1, %c0_2] : memref<32x128xbf16, #tpu.memory_space<vmem>>, vector<32x128xbf16>
    %cst = arith.constant dense<0.000000e+00> : vector<32x128xf32>
    %2 = tpu.matmul %0, %1, %cst {dimension_numbers = #tpu.dot_dimension_numbers<[1], [0], [0], [1], [0, 0, 1, 1], [], []>} : vector<32x32xbf16>, vector<32x128xbf16>, vector<32x128xf32> -> vector<32x128xf32>
    %c0_3 = arith.constant 0 : index
    %c0_4 = arith.constant 0 : index
    %3 = vector.load %arg3[%c0_3, %c0_4] : memref<1x128xf32, #tpu.memory_space<vmem>>, vector<1x128xf32>
    %4 = vector.broadcast %3 : vector<1x128xf32> to vector<32x128xf32>
    %5 = arith.addf %2, %4 : vector<32x128xf32>
    %c0_5 = arith.constant 0 : index
    %c0_6 = arith.constant 0 : index
    %6 = vector.load %arg4[%c0_5, %c0_6] : memref<32x1xf32, #tpu.memory_space<vmem>>, vector<32x1xf32>
    %7 = vector.broadcast %6 : vector<32x1xf32> to vector<32x128xf32>
    %8 = arith.mulf %5, %7 : vector<32x128xf32>
    %c0_7 = arith.constant 0 : index
    %c0_8 = arith.constant 0 : index
    %c0_9 = arith.constant 0 : index
    %9 = vector.load %arg5[%c0_7, %c0_8, %c0_9] : memref<1x32x128xbf16, #tpu.memory_space<vmem>>, vector<1x32x128xbf16>
    %10 = vector.shape_cast %9 : vector<1x32x128xbf16> to vector<32x128xbf16>
    %11 = arith.extf %10 : vector<32x128xbf16> to vector<32x128xf32>
    %12 = arith.addf %8, %11 : vector<32x128xf32>
    %13 = arith.truncf %12 : vector<32x128xf32> to vector<32x128xbf16>
    %c0_10 = arith.constant 0 : index
    %c0_11 = arith.constant 0 : index
    %14 = vector.load %arg6[%c0_10, %c0_11] : memref<32x128xbf16, #tpu.memory_space<vmem>>, vector<32x128xbf16>
    tpu.vector_store %arg6[%c0_10, %c0_11], %13 {strides = array<i32>} : memref<32x128xbf16, #tpu.memory_space<vmem>>, vector<32x128xbf16>,
    return
  }
  func.func @transform_0(%arg0: i32) -> (i32, i32) {
    %c0_i32 = arith.constant 0 : i32
    %c0_i32_0 = arith.constant 0 : i32
    return %arg0, %c0_i32 : i32, i32
  }
  func.func @transform_1(%arg0: i32) -> (i32, i32) {
    %c0_i32 = arith.constant 0 : i32
    %c0_i32_0 = arith.constant 0 : i32
    %c0_i32_1 = arith.constant 0 : i32
    return %c0_i32, %c0_i32_0 : i32, i32
  }
  func.func @transform_2(%arg0: i32) -> (i32, i32) {
    %c0_i32 = arith.constant 0 : i32
    %c0_i32_0 = arith.constant 0 : i32
    %c0_i32_1 = arith.constant 0 : i32
    return %c0_i32, %c0_i32_0 : i32, i32
  }
  func.func @transform_3(%arg0: i32) -> (i32, i32) {
    %c0_i32 = arith.constant 0 : i32
    %c0_i32_0 = arith.constant 0 : i32
    return %arg0, %c0_i32 : i32, i32
  }
  func.func @transform_4(%arg0: i32) -> (i32, i32, i32) {
    %c0_i32 = arith.constant 0 : i32
    %c0_i32_0 = arith.constant 0 : i32
    %c0_i32_1 = arith.constant 0 : i32
    %c0_i32_2 = arith.constant 0 : i32
    return %c0_i32, %c0_i32_0, %c0_i32_1 : i32, i32, i32
  }
  func.func @transform_5(%arg0: i32) -> (i32, i32) {
    %c0_i32 = arith.constant 0 : i32
    %c0_i32_0 = arith.constant 0 : i32
    return %arg0, %c0_i32 : i32, i32
  }
}

</mosaic_0001>

<llo_original>
// kernel: tpu_custom_call.1
$region0: #{tpu_custom_call.1}
  #allocation0 [shape = 'u32[]', space=smem, size = 0x4, offset = 0x4, fixed_abs, tag = 'smem constant byte address 0x4 - core index']
  #allocation1 [shape = 'u32[144,128]{1,0:T(1,128)}', space=vmem, size = 0x12000, scoped, tag = 'internal scratch']
  %s0 = inlined_call_operand.vmem [shape: bf16[32,32], index: 0, kind: input, shape index: {}]
  %s1 = inlined_call_operand.vmem [shape: bf16[32,128], index: 1, kind: input, shape index: {}]
  %s2 = inlined_call_operand.hbm [shape: f32[1,128], index: 2, kind: input, shape index: {}]
  %s3 = inlined_call_operand.vmem [shape: f32[32,1], index: 3, kind: input, shape index: {}]
  %s4 = inlined_call_operand.vmem [shape: bf16[1,32,128], index: 4, kind: input, shape index: {}]
  %s5 = inlined_call_operand.hbm [shape: bf16[32,128], index: 5, kind: output, shape index: {}]
  %s6 = sld [smem:[#allocation0]]
  $region34: #{tpu_custom_call.1} parent=0
    _
  %s8 = ssub.s32 1, %s6
  %s9 = scalar_select 0, %s8, %s6
  $region1: #{tpu_custom_call.1} parent=0
    #allocation2 [shape = 'u8[512]{0}', space=vmem, size = 0x400, scoped, tag = 'input window, operand 2, single buffered']
    #allocation3 [shape = 's32[1]{0}', space=sflag, size = 0x4, scoped, tag = 'scoped memory for tpu_custom_call.1']
    #allocation4 [shape = 's32[1]{0}', space=sflag, size = 0x4, scoped, tag = 'scoped memory for tpu_custom_call.1']
    #allocation5 [shape = 'u8[8192]{0}', space=vmem, size = 0x2000, scoped, tag = 'output window, operand 0, single buffered']
    %10 = vsyncpa [#allocation3], 0
    %11 = vsyncpa [#allocation4], 0
    // Predicated region
    $region2: #{tpu_custom_call.1} parent=1 // pred_check
      _
    $region3: #{tpu_custom_call.1} parent=1 // pred_check_branch
      %13 = sbr.rel (0) target = $region5
    $region4: #{tpu_custom_call.1} parent=1 // pred_region
      _
    $region5: #{tpu_custom_call.1} parent=1 // pred_fallthru
      _
    // Predicated region
    $region6: #{tpu_custom_call.1} parent=1 // pred_check
      _
    $region7: #{tpu_custom_call.1} parent=1 // pred_check_branch
      %15 = sbr.rel (0) target = $region9
    $region8: #{tpu_custom_call.1} parent=1 // pred_region
      _
    $region9: #{tpu_custom_call.1} parent=1 // pred_fallthru
      _
    // Predicated region
    $region10: #{tpu_custom_call.1} parent=1 // pred_check
      _
    $region11: #{tpu_custom_call.1} parent=1 // pred_check_branch
      %17 = sbr.rel (0) target = $region13
    $region12: #{tpu_custom_call.1} parent=1 // pred_region
      %s19 = ssub.s32 16, 16
      %20 = vsyncadd [#allocation3], %s19
      %s22 = sshll.u32 [#allocation2], 4
      %s23 = int_to_ptr.vmem [resolvable:$true] %s22
      %25 = dma.hbm_to_vmem [thread:$0]  %s2, 16, %s23, [#allocation3]
    $region13: #{tpu_custom_call.1} parent=1 // pred_fallthru
      _
    // Predicated region
    $region14: #{tpu_custom_call.1} parent=1 // pred_check
      _
    $region15: #{tpu_custom_call.1} parent=1 // pred_check_branch
      %27 = sbr.rel (0) target = $region17
    $region16: #{tpu_custom_call.1} parent=1 // pred_region
      _
    $region17: #{tpu_custom_call.1} parent=1 // pred_fallthru
      _
    // Predicated region
    $region18: #{tpu_custom_call.1} parent=1 // pred_check
      _
    $region19: #{tpu_custom_call.1} parent=1 // pred_check_branch
      %29 = sbr.rel (0) target = $region21
    $region20: #{tpu_custom_call.1} parent=1 // pred_region
      _
    $region21: #{tpu_custom_call.1} parent=1 // pred_fallthru
      _
    // Predicated region
    $region22: #{tpu_custom_call.1} parent=1 // pred_check
      _
    $region23: #{tpu_custom_call.1} parent=1 // pred_check_branch
      %31 = sbr.rel (0) target = $region25
    $region24: #{tpu_custom_call.1} parent=1 // pred_region
      %32 = dma.done [#allocation3], 16
    $region25: #{tpu_custom_call.1} parent=1 // pred_fallthru
      _
    %v34 = vld [vmem:[%s0] sm:$0xf]
    %v35 = vld [vmem:[%s0 + $0x4] sm:$0xf]
    %v36 = vld [vmem:[%s0 + $0x8] sm:$0xf]
    %v37 = vld [vmem:[%s0 + $0xc] sm:$0xf]
    %v38 = vld [vmem:[%s1] sm:$0xf]
    %v39 = vld [vmem:[%s1 + $0x4] sm:$0xf]
    %v40 = vld [vmem:[%s1 + $0x8] sm:$0xf]
    %v41 = vld [vmem:[%s1 + $0xc] sm:$0xf]
    %v42 = vld [vmem:[#allocation2] sm:$0x1]
    %v44 = vlaneseq
    %v45 = vshrl.u32 %v44, 7
    %v46 = vsub.s32 0, %v45
    %v47 = vrot.slane %v42, %v46
    %v53 = vunpack.c.l.b16 %v34
    %v54 = vunpack.c.l.b16 %v35
    %v55 = vunpack.c.l.b16 %v36
    %v56 = vunpack.c.l.b16 %v37
    %v57 = vpack.c.b16 %v54, %v53
    %v58 = vpack.c.b16 %v56, %v55
    %v63 = vunpack.c.l.b16 %v38
    %v64 = vunpack.c.l.b16 %v39
    %v65 = vunpack.c.l.b16 %v40
    %v66 = vunpack.c.l.b16 %v41
    %v67 = vpack.c.b16 %v64, %v63
    %v68 = vpack.c.b16 %v66, %v65
    %vm71 = vcmask 261120
    %v73 = vsel %vm71, %v57, 0
    %v76 = vsel %vm71, %v58, 0
    %78 = vmatprep.subr.bf16.mxu0 0
    %79 = vmatpush1.bf16.msra.mxu0 %v67
    %80 = vmatprep.subr.bf16.mxu0 0
    %81 = vmatpush1.bf16.msra.mxu0 %v68
    %82 = vmatprep.subr.bf16.mxu0 0
    %83 = vmatpush1.bf16.msra.mxu0 0
    %84 = vmatprep.subr.bf16.mxu0 0
    %85 = vmatpush1.bf16.msra.mxu0 0
    %86 = vmatprep.subr.bf16.mxu0 0
    %87 = vmatpush1.bf16.msra.mxu0 0
    %88 = vmatprep.subr.bf16.mxu0 0
    %89 = vmatpush1.bf16.msra.mxu0 0
    %90 = vmatprep.subr.bf16.mxu0 0
    %91 = vmatpush1.bf16.msra.mxu0 0
    %92 = vmatprep.subr.bf16.mxu0 0
    %93 = vmatpush1.bf16.msra.mxu0 0
    %94 = vmatprep.subr.bf16.mxu0 0
    %95 = vmatpush1.bf16.msra.mxu0 0
    %96 = vmatprep.subr.bf16.mxu0 0
    %97 = vmatpush1.bf16.msra.mxu0 0
    %98 = vmatprep.subr.bf16.mxu0 0
    %99 = vmatpush1.bf16.msra.mxu0 0
    %100 = vmatprep.subr.bf16.mxu0 0
    %101 = vmatpush1.bf16.msra.mxu0 0
    %102 = vmatprep.subr.bf16.mxu0 0
    %103 = vmatpush1.bf16.msra.mxu0 0
    %104 = vmatprep.subr.bf16.mxu0 0
    %105 = vmatpush1.bf16.msra.mxu0 0
    %106 = vmatprep.subr.bf16.mxu0 0
    %107 = vmatpush1.bf16.msra.mxu0 0
    %108 = vmatprep.subr.bf16.mxu0 0
    %109 = vmatpush1.bf16.msra.mxu0 0
    %110 = vmatprep.mubr.bf16.mxu0 0
    %111 = vmatmul.mubr.bf16.gmra.mrb[0].mxu0 %v73
    %v112 = vpop.f32.mrb[0].mxu0
    %v113 = vadd.f32 %v47, %v112
    %v114 = vpop.f32.mrb[0].mxu0
    %v115 = vpop.f32.mrb[0].mxu0
    %v116 = vadd.f32 %v47, %v115
    %v117 = vpop.f32.mrb[0].mxu0
    %118 = vmatprep.mubr.bf16.mxu0 0
    %119 = vmatmul.mubr.bf16.gmra.mrb[0].mxu0 %v76
    %v120 = vpop.f32.mrb[0].mxu0
    %v121 = vadd.f32 %v47, %v120
    %v122 = vpop.f32.mrb[0].mxu0
    %v123 = vpop.f32.mrb[0].mxu0
    %v124 = vadd.f32 %v47, %v123
    %v125 = vpop.f32.mrb[0].mxu0
    %126 = vdwg.mxu0
    %v127 = vld [vmem:[%s3] sm:$0xff]
    %v128 = vld [vmem:[%s3 + $0x8] sm:$0xff]
    %v129 = vld [vmem:[%s3 + $0x10] sm:$0xff]
    %v130 = vld [vmem:[%s3 + $0x18] sm:$0xff]
    %132 = vset.pattern.permute.xlu0 0
    %133 = vperm.xlu0 %132, %v127
    %v134 = vpop.permute.xlu0 %133
    %137 = vset.pattern.permute.xlu0 0
    %138 = vperm.xlu0 %137, %v128
    %v139 = vpop.permute.xlu0 %138
    %142 = vset.pattern.permute.xlu0 0
    %143 = vperm.xlu0 %142, %v129
    %v144 = vpop.permute.xlu0 %143
    %147 = vset.pattern.permute.xlu0 0
    %148 = vperm.xlu0 %147, %v130
    %v149 = vpop.permute.xlu0 %148
    %v151 = vmul.f32 %v113, %v134
    %v152 = vmul.f32 %v116, %v139
    %v153 = vmul.f32 %v121, %v144
    %v154 = vmul.f32 %v124, %v149
    %v155 = vld [vmem:[%s4] sm:$0xf]
    %v156 = vld [vmem:[%s4 + $0x4] sm:$0xf]
    %v157 = vld [vmem:[%s4 + $0x8] sm:$0xf]
    %v158 = vld [vmem:[%s4 + $0xc] sm:$0xf]
    %v159 = vunpack.c.l.bf16 %v155
    %v160 = vunpack.c.l.bf16 %v156
    %v161 = vunpack.c.l.bf16 %v157
    %v162 = vunpack.c.l.bf16 %v158
    %v163 = vadd.f32 %v151, %v159
    %v164 = vadd.f32 %v152, %v160
    %v165 = vadd.f32 %v153, %v161
    %v166 = vadd.f32 %v154, %v162
    %v167 = vpack.c.bf16 %v164, %v163
    %v168 = vpack.c.bf16 %v166, %v165
    %v171 = vunpack.c.l.b16 %v167
    %v172 = vunpack.c.h.b16 %v167
    %v173 = vunpack.c.l.b16 %v168
    %v174 = vunpack.c.h.b16 %v168
    %v175 = vpack.c.b16 %v171, %v171
    %v176 = vpack.c.b16 %v172, %v172
    %v177 = vpack.c.b16 %v173, %v173
    %v178 = vpack.c.b16 %v174, %v174
    %183 = vst [vmem:[#allocation5] sm:$0xf] %v175
    %184 = vst [vmem:[#allocation5 + $0x4] sm:$0xf] %v176
    %185 = vst [vmem:[#allocation5 + $0x8] sm:$0xf] %v177
    %186 = vst [vmem:[#allocation5 + $0xc] sm:$0xf] %v178
    // Predicated region
    $region26: #{tpu_custom_call.1} parent=1 // pred_check
      _
    $region27: #{tpu_custom_call.1} parent=1 // pred_check_branch
      %188 = sbr.rel (0) target = $region29
    $region28: #{tpu_custom_call.1} parent=1 // pred_region
      %s190 = ssub.s32 256, 256
      %191 = vsyncadd [#allocation4], %s190
      %s192 = sshll.u32 [#allocation5], 4
      %s193 = int_to_ptr.vmem [resolvable:$true] %s192
      %198 = dma.vmem_to_hbm [thread:$0]  %s193, 256, %s5, [#allocation4], 64, 64, 4
    $region29: #{tpu_custom_call.1} parent=1 // pred_fallthru
      _
    // Predicated region
    $region30: #{tpu_custom_call.1} parent=1 // pred_check
      _
    $region31: #{tpu_custom_call.1} parent=1 // pred_check_branch
      %200 = sbr.rel (0) target = $region33
    $region32: #{tpu_custom_call.1} parent=1 // pred_region
      %201 = dma.done [#allocation4], 256
    $region33: #{tpu_custom_call.1} parent=1 // pred_fallthru
      _
    %202 = vsyncpa [#allocation3], 1
    %203 = vsyncpa [#allocation4], 1

</llo_original>
